<compile_context>
chip_gen: v5e
topology: v5e:2x2
jax: 0.10.0
libtpu: 0.0.40
codegen_flags: <defaults>
</compile_context>

<pallas_src>
import functools

import jax
import jax.numpy as jnp
from jax.experimental import pallas as pl
from jax.experimental.pallas import tpu as pltpu


def _cimle_kernel(z_ref, lat_ref, w1_ref, b1_ref, w2_ref, b2_ref, s_ref,
                  out_ref, diff_ref):
    z = z_ref[...]
    lat = lat_ref[...]

    # 'add_linear_res': embedding = latent + zs  (packed layout, elementwise)
    h = lat + z

    # MLP layer 1: block-diagonal Linear + ReLU (f32 accumulation on the MXU)
    h1 = jnp.dot(h, w1_ref[...], preferred_element_type=jnp.float32)
    h1 = jnp.maximum(h1 + b1_ref[...].astype(jnp.float32), 0.0)
    h1 = h1.astype(w2_ref.dtype)

    # MLP layer 2: block-diagonal Linear (no out_activation)
    h2 = jnp.dot(h1, w2_ref[...], preferred_element_type=jnp.float32)
    h2 = h2 + b2_ref[...].astype(jnp.float32)

    # residual output (lane-dense full-width store)
    out_ref[...] = (lat.astype(jnp.float32) + h2).astype(out_ref.dtype)

    # diff = mean((orig - out)^2, -1) == mean(mlp(h)^2, -1); segmented mean over
    # the `pack` D-wide lane segments via a tiny matmul (MXU has plenty of slack).
    diff_ref[...] = jnp.dot(h2 * h2, s_ref[...],
                            preferred_element_type=jnp.float32)


def _round_up(x, m):
    return -(-x // m) * m


def pack_cimle_params(w1, b1, w2, b2):
    """Build packed (block-diagonal) MLP params ONCE when the weights are set.

    Hoisted out of the per-call forward (perf review): the kron/tile/eye ops are
    tiny (~130 KB) but would otherwise be re-materialised as extra XLA ops on
    every forward call.
    """
    D = w1.shape[0]
    assert w1.shape == (D, D) and w2.shape == (D, D)
    # Lane packing factor: pack `pack` samples per 128-lane row when possible.
    pack = 128 // D if (D < 128 and 128 % D == 0) else 1
    if pack == 1 and D < 128:
        # Perf cliff (not a bug): D that does not divide 128 falls back to
        # under-filled lanes and masked stores on the main output.
        print(f"pack_cimle_params: D={D} does not divide 128; running unpacked")
    b1 = b1.reshape(1, D)
    b2 = b2.reshape(1, D)
    if pack > 1:
        w1_p = jnp.kron(jnp.eye(pack, dtype=w1.dtype), w1)
        w2_p = jnp.kron(jnp.eye(pack, dtype=w2.dtype), w2)
        b1_p = jnp.tile(b1, (1, pack))
        b2_p = jnp.tile(b2, (1, pack))
    else:
        w1_p, b1_p, w2_p, b2_p = w1, b1, w2, b2
    # seg_mean reduces each D-wide lane segment to its mean (for diff).
    seg_mean = jnp.kron(jnp.eye(pack, dtype=jnp.float32),
                        jnp.full((D, 1), 1.0 / D, dtype=jnp.float32))
    return (w1_p, b1_p, w2_p, b2_p, seg_mean)


@functools.partial(jax.jit, static_argnames=("max_tile_rows",))
def cimle_field_forward(zs, original_latent, packed_params, max_tile_rows=2048):
    """zs, original_latent: (..., D). Returns (out (..., D), diff (...,))."""
    w1_p, b1_p, w2_p, b2_p, seg_mean = packed_params
    *batch_shape, D = original_latent.shape
    L = w1_p.shape[0]
    pack = L // D
    assert L == D * pack and seg_mean.shape == (L, pack)
    assert zs.shape[-1] == D, "add_linear_res requires in_cimle_ch == feature_in_dim"

    lat2 = original_latent.reshape(-1, D)
    zs2 = zs.reshape(-1, D)
    N = lat2.shape[0]
    assert zs2.shape[0] == N, "cimle latent rows must match latent rows"

    # Pack `pack` samples per 128-lane row.  When N % pack == 0 (the common
    # case) this is a pure reshape — no wrapper-side copy at all.
    rows = -(-N // pack)
    n_packed = rows * pack
    if n_packed != N:
        # Rare fallback: minimal pad to pack granularity only (never to tile
        # granularity — the ragged tail is handled by the partial last block).
        lat2 = jnp.pad(lat2, ((0, n_packed - N), (0, 0)))
        zs2 = jnp.pad(zs2, ((0, n_packed - N), (0, 0)))
    lat_p = lat2.reshape(rows, L)
    zs_p = zs2.reshape(rows, L)

    # Tile sizing: big tiles amortise the ~0.35us per-grid-step overhead
    # (2048 packed rows = 8192 samples ~= 1 MiB per f32 input buffer), capped so
    # the 1-D 'parallel' grid keeps >= 4 steps for v7x's two TensorCores when
    # there is enough work, and never shrinks below 1024 rows in that regime.
    tile_rows = min(_round_up(max_tile_rows, 8), _round_up(rows, 8))
    if rows >= 4 * 1024:
        tile_rows = min(tile_rows, max(1024, _round_up(-(-rows // 4), 8)))
    grid = pl.cdiv(rows, tile_rows)   # partial last block; no pad-to-tile copies

    act_bytes = jnp.dtype(original_latent.dtype).itemsize
    w_bytes = jnp.dtype(w1_p.dtype).itemsize
    cost = pl.CostEstimate(
        flops=int(rows * (4 * L * L + 2 * L * pack + 8 * L)),
        transcendentals=0,
        bytes_accessed=int(rows * L * 3 * act_bytes
                           + rows * pack * 4
                           + 2 * L * L * w_bytes + 2 * L * w_bytes
                           + L * pack * 4),
    )

    out_p, diff_p = pl.pallas_call(
        _cimle_kernel,
        out_shape=(
            jax.ShapeDtypeStruct((rows, L), original_latent.dtype),
            jax.ShapeDtypeStruct((rows, pack), jnp.float32),
        ),
        grid_spec=pltpu.PrefetchScalarGridSpec(
            num_scalar_prefetch=0,
            grid=(grid,),
            in_specs=[
                pl.BlockSpec((tile_rows, L), lambda i: (i, 0)),   # zs (packed)
                pl.BlockSpec((tile_rows, L), lambda i: (i, 0)),   # latent (packed)
                pl.BlockSpec((L, L), lambda i: (0, 0)),           # W1 (block-diag)
                pl.BlockSpec((1, L), lambda i: (0, 0)),           # b1 (tiled)
                pl.BlockSpec((L, L), lambda i: (0, 0)),           # W2 (block-diag)
                pl.BlockSpec((1, L), lambda i: (0, 0)),           # b2 (tiled)
                pl.BlockSpec((L, pack), lambda i: (0, 0)),        # segmented-mean mat
            ],
            out_specs=[
                pl.BlockSpec((tile_rows, L), lambda i: (i, 0)),   # out latent (packed)
                pl.BlockSpec((tile_rows, pack), lambda i: (i, 0)),  # diff (packed)
            ],
        ),
        compiler_params=pltpu.CompilerParams(
            dimension_semantics=("parallel",),
            vmem_limit_bytes=32 * 1024 * 1024),
        cost_estimate=cost,
    )(zs_p, lat_p, w1_p, b1_p, w2_p, b2_p, seg_mean)

    out = out_p.reshape(n_packed, D)
    diff = diff_p.reshape(n_packed)
    if n_packed != N:
        out = out[:N]
        diff = diff[:N]
    out = out.reshape(*batch_shape, D)
    diff = diff.reshape(tuple(batch_shape))
    return out, diff


def _reference(zs, lat, w1, b1, w2, b2):
    lat32 = lat.astype(jnp.float32)
    h = lat32 + zs.astype(jnp.float32)
    h1 = jnp.maximum(h @ w1.astype(jnp.float32) + b1.astype(jnp.float32), 0.0)
    h2 = h1 @ w2.astype(jnp.float32) + b2.astype(jnp.float32)
    out = lat32 + h2
    diff = jnp.mean((lat32 - out) ** 2, axis=-1)
    return out, diff


if __name__ == "__main__":
    # Config: in_cimle_ch == feature_in_dim == D (required for add_linear_res)
    B, S, D = 2, 64, 32            # ray_samples.shape == (B, S); latent dim D
    key = jax.random.PRNGKey(0)
    k_z, k_lat, k_w1, k_b1, k_w2, k_b2 = jax.random.split(key, 6)

    zs = jax.random.normal(k_z, (B * S, D), jnp.float32)            # cimle_latent
    original_latent = jax.random.normal(k_lat, (B, S, D), jnp.float32)

    # Deterministic parameter init (PyTorch-Linear-style uniform bound).
    bound = 1.0 / (D ** 0.5)
    w1 = jax.random.uniform(k_w1, (D, D), jnp.float32, -bound, bound)
    b1 = jax.random.uniform(k_b1, (1, D), jnp.float32, -bound, bound)
    w2 = jax.random.uniform(k_w2, (D, D), jnp.float32, -bound, bound)
    b2 = jax.random.uniform(k_b2, (1, D), jnp.float32, -bound, bound)

    zs_reshaped = zs.reshape(B, S, D)   # zs.reshape(list(sh) + [in_cimle_ch])

    # ---- f32 path: matches the PyTorch reference exactly -------------------
    params_f32 = pack_cimle_params(w1, b1, w2, b2)   # hoisted one-time packing
    out, diff = cimle_field_forward(zs_reshaped, original_latent, params_f32)
    out = jax.block_until_ready(out)
    diff = jax.block_until_ready(diff)

    ref_out, ref_diff = _reference(zs_reshaped, original_latent, w1, b1, w2, b2)
    assert out.shape == (B, S, D) and diff.shape == (B, S)
    assert jnp.allclose(out, ref_out, atol=1e-5, rtol=1e-5)
    assert jnp.allclose(diff, ref_diff, atol=1e-5, rtol=1e-5)

    # ---- bf16 activation/weight path: halves dominant HBM traffic ----------
    # (f32 MXU accumulation; diff is computed from f32 pre-downcast activations,
    #  so it may differ slightly from mean((lat - out_bf16)^2) — documented.)
    params_bf16 = pack_cimle_params(
        w1.astype(jnp.bfloat16), b1.astype(jnp.bfloat16),
        w2.astype(jnp.bfloat16), b2.astype(jnp.bfloat16))
    out_bf, diff_bf = cimle_field_forward(
        zs_reshaped.astype(jnp.bfloat16),
        original_latent.astype(jnp.bfloat16),
        params_bf16)
    out_bf = jax.block_until_ready(out_bf)
    diff_bf = jax.block_until_ready(diff_bf)

    ref_out_bf, ref_diff_bf = _reference(
        zs_reshaped.astype(jnp.bfloat16), original_latent.astype(jnp.bfloat16),
        w1.astype(jnp.bfloat16), b1.astype(jnp.bfloat16),
        w2.astype(jnp.bfloat16), b2.astype(jnp.bfloat16))
    assert out_bf.dtype == jnp.bfloat16 and out_bf.shape == (B, S, D)
    assert diff_bf.shape == (B, S)
    assert jnp.allclose(out_bf.astype(jnp.float32), ref_out_bf,
                        atol=1e-1, rtol=5e-2)
    assert jnp.allclose(diff_bf, ref_diff_bf, atol=1e-1, rtol=5e-2)

    # TODO(synk): use_cimle_grid=True path (HashEncoding) not implemented; kernel
    # covers the latent-metadata path with cimle_type='add_linear_res'.
    print("KERNEL_OK")
</pallas_src>

<mosaic_0001>
module attributes {stable_mosaic.version = 11 : i64} {
  func.func @_cimle_kernel(%arg0: i32, %arg1: memref<32x128xf32, #tpu.memory_space<vmem>>, %arg2: memref<32x128xf32, #tpu.memory_space<vmem>>, %arg3: memref<128x128xf32, #tpu.memory_space<vmem>>, %arg4: memref<1x128xf32, #tpu.memory_space<vmem>>, %arg5: memref<128x128xf32, #tpu.memory_space<vmem>>, %arg6: memref<1x128xf32, #tpu.memory_space<vmem>>, %arg7: memref<128x4xf32, #tpu.memory_space<vmem>>, %arg8: memref<32x128xf32, #tpu.memory_space<vmem>>, %arg9: memref<32x4xf32, #tpu.memory_space<vmem>>) attributes {dimension_semantics = [#tpu.dimension_semantics<parallel>], iteration_bounds = array<i64: 1>, scalar_prefetch = 0 : i64, scratch_operands = 0 : i64, tpu.core_type = #tpu.core_type<tc>, window_params = [{transform_indices = @transform_0, window_bounds = array<i64: 32, 128>}, {transform_indices = @transform_1, window_bounds = array<i64: 32, 128>}, {pipeline_mode = #tpu.pipeline_mode<synchronous>, transform_indices = @transform_2, window_bounds = array<i64: 128, 128>}, {pipeline_mode = #tpu.pipeline_mode<synchronous>, transform_indices = @transform_3, window_bounds = array<i64: 1, 128>}, {pipeline_mode = #tpu.pipeline_mode<synchronous>, transform_indices = @transform_4, window_bounds = array<i64: 128, 128>}, {pipeline_mode = #tpu.pipeline_mode<synchronous>, transform_indices = @transform_5, window_bounds = array<i64: 1, 128>}, {pipeline_mode = #tpu.pipeline_mode<synchronous>, transform_indices = @transform_6, window_bounds = array<i64: 128, 4>}, {transform_indices = @transform_7, window_bounds = array<i64: 32, 128>}, {transform_indices = @transform_8, window_bounds = array<i64: 32, 4>}]} {
    %c0 = arith.constant 0 : index
    %c0_0 = arith.constant 0 : index
    %0 = vector.load %arg1[%c0, %c0_0] : memref<32x128xf32, #tpu.memory_space<vmem>>, vector<32x128xf32>
    %c0_1 = arith.constant 0 : index
    %c0_2 = arith.constant 0 : index
    %1 = vector.load %arg2[%c0_1, %c0_2] : memref<32x128xf32, #tpu.memory_space<vmem>>, vector<32x128xf32>
    %2 = arith.addf %1, %0 : vector<32x128xf32>
    %c0_3 = arith.constant 0 : index
    %c0_4 = arith.constant 0 : index
    %3 = vector.load %arg3[%c0_3, %c0_4] : memref<128x128xf32, #tpu.memory_space<vmem>>, vector<128x128xf32>
    %cst = arith.constant dense<0.000000e+00> : vector<32x128xf32>
    %4 = tpu.matmul %2, %3, %cst {dimension_numbers = #tpu.dot_dimension_numbers<[1], [0], [0], [1], [0, 0, 1, 1], [], []>} : vector<32x128xf32>, vector<128x128xf32>, vector<32x128xf32> -> vector<32x128xf32>
    %c0_5 = arith.constant 0 : index
    %c0_6 = arith.constant 0 : index
    %5 = vector.load %arg4[%c0_5, %c0_6] : memref<1x128xf32, #tpu.memory_space<vmem>>, vector<1x128xf32>
    %6 = vector.broadcast %5 : vector<1x128xf32> to vector<32x128xf32>
    %7 = arith.addf %4, %6 : vector<32x128xf32>
    %cst_7 = arith.constant 0.000000e+00 : f32
    %8 = vector.broadcast %cst_7 : f32 to vector<32x128xf32>
    %9 = arith.maximumf %7, %8 : vector<32x128xf32>
    %c0_8 = arith.constant 0 : index
    %c0_9 = arith.constant 0 : index
    %10 = vector.load %arg5[%c0_8, %c0_9] : memref<128x128xf32, #tpu.memory_space<vmem>>, vector<128x128xf32>
    %cst_10 = arith.constant dense<0.000000e+00> : vector<32x128xf32>
    %11 = tpu.matmul %9, %10, %cst_10 {dimension_numbers = #tpu.dot_dimension_numbers<[1], [0], [0], [1], [0, 0, 1, 1], [], []>} : vector<32x128xf32>, vector<128x128xf32>, vector<32x128xf32> -> vector<32x128xf32>
    %c0_11 = arith.constant 0 : index
    %c0_12 = arith.constant 0 : index
    %12 = vector.load %arg6[%c0_11, %c0_12] : memref<1x128xf32, #tpu.memory_space<vmem>>, vector<1x128xf32>
    %13 = vector.broadcast %12 : vector<1x128xf32> to vector<32x128xf32>
    %14 = arith.addf %11, %13 : vector<32x128xf32>
    %15 = arith.addf %1, %14 : vector<32x128xf32>
    %c0_13 = arith.constant 0 : index
    %c0_14 = arith.constant 0 : index
    %16 = vector.load %arg8[%c0_13, %c0_14] : memref<32x128xf32, #tpu.memory_space<vmem>>, vector<32x128xf32>
    tpu.vector_store %arg8[%c0_13, %c0_14], %15 {strides = array<i32>} : memref<32x128xf32, #tpu.memory_space<vmem>>, vector<32x128xf32>,
    %17 = arith.mulf %14, %14 : vector<32x128xf32>
    %c0_15 = arith.constant 0 : index
    %c0_16 = arith.constant 0 : index
    %18 = vector.load %arg7[%c0_15, %c0_16] : memref<128x4xf32, #tpu.memory_space<vmem>>, vector<128x4xf32>
    %cst_17 = arith.constant dense<0.000000e+00> : vector<32x4xf32>
    %19 = tpu.matmul %17, %18, %cst_17 {dimension_numbers = #tpu.dot_dimension_numbers<[1], [0], [0], [1], [0, 0, 1, 1], [], []>} : vector<32x128xf32>, vector<128x4xf32>, vector<32x4xf32> -> vector<32x4xf32>
    %c0_18 = arith.constant 0 : index
    %c0_19 = arith.constant 0 : index
    %20 = vector.load %arg9[%c0_18, %c0_19] : memref<32x4xf32, #tpu.memory_space<vmem>>, vector<32x4xf32>
    tpu.vector_store %arg9[%c0_18, %c0_19], %19 {strides = array<i32>} : memref<32x4xf32, #tpu.memory_space<vmem>>, vector<32x4xf32>,
    return
  }
  func.func @transform_0(%arg0: i32) -> (i32, i32) {
    %c0_i32 = arith.constant 0 : i32
    %c0_i32_0 = arith.constant 0 : i32
    return %arg0, %c0_i32 : i32, i32
  }
  func.func @transform_1(%arg0: i32) -> (i32, i32) {
    %c0_i32 = arith.constant 0 : i32
    %c0_i32_0 = arith.constant 0 : i32
    return %arg0, %c0_i32 : i32, i32
  }
  func.func @transform_2(%arg0: i32) -> (i32, i32) {
    %c0_i32 = arith.constant 0 : i32
    %c0_i32_0 = arith.constant 0 : i32
    %c0_i32_1 = arith.constant 0 : i32
    return %c0_i32, %c0_i32_0 : i32, i32
  }
  func.func @transform_3(%arg0: i32) -> (i32, i32) {
    %c0_i32 = arith.constant 0 : i32
    %c0_i32_0 = arith.constant 0 : i32
    %c0_i32_1 = arith.constant 0 : i32
    return %c0_i32, %c0_i32_0 : i32, i32
  }
  func.func @transform_4(%arg0: i32) -> (i32, i32) {
    %c0_i32 = arith.constant 0 : i32
    %c0_i32_0 = arith.constant 0 : i32
    %c0_i32_1 = arith.constant 0 : i32
    return %c0_i32, %c0_i32_0 : i32, i32
  }
  func.func @transform_5(%arg0: i32) -> (i32, i32) {
    %c0_i32 = arith.constant 0 : i32
    %c0_i32_0 = arith.constant 0 : i32
    %c0_i32_1 = arith.constant 0 : i32
    return %c0_i32, %c0_i32_0 : i32, i32
  }
  func.func @transform_6(%arg0: i32) -> (i32, i32) {
    %c0_i32 = arith.constant 0 : i32
    %c0_i32_0 = arith.constant 0 : i32
    %c0_i32_1 = arith.constant 0 : i32
    return %c0_i32, %c0_i32_0 : i32, i32
  }
  func.func @transform_7(%arg0: i32) -> (i32, i32) {
    %c0_i32 = arith.constant 0 : i32
    %c0_i32_0 = arith.constant 0 : i32
    return %arg0, %c0_i32 : i32, i32
  }
  func.func @transform_8(%arg0: i32) -> (i32, i32) {
    %c0_i32 = arith.constant 0 : i32
    %c0_i32_0 = arith.constant 0 : i32
    return %arg0, %c0_i32 : i32, i32
  }
}

</mosaic_0001>

<llo_original>
// kernel: cimle_field_forward.1
$region0: #{cimle_field_forward.1}
  #allocation0 [shape = 'u32[]', space=smem, size = 0x4, offset = 0x4, fixed_abs, tag = 'smem constant byte address 0x4 - core index']
  #allocation1 [shape = 'u32[72,128]{1,0:T(1,128)}', space=vmem, size = 0x9000, scoped, tag = 'internal scratch']
  %s0 = inlined_call_operand.vmem [shape: f32[32,128], index: 0, kind: input, shape index: {}]
  %s1 = inlined_call_operand.vmem [shape: f32[32,128], index: 1, kind: input, shape index: {}]
  %s2 = inlined_call_operand.vmem [shape: f32[128,128], index: 2, kind: input, shape index: {}]
  %s3 = inlined_call_operand.vmem [shape: f32[1,128], index: 3, kind: input, shape index: {}]
  %s4 = inlined_call_operand.vmem [shape: f32[128,128], index: 4, kind: input, shape index: {}]
  %s5 = inlined_call_operand.vmem [shape: f32[1,128], index: 5, kind: input, shape index: {}]
  %s6 = inlined_call_operand.vmem [shape: f32[128,4], index: 6, kind: input, shape index: {}]
  %s7 = inlined_call_operand.vmem [shape: f32[32,128], index: 7, kind: output, shape index: {0}]
  %s8 = inlined_call_operand.vmem [shape: f32[32,4], index: 8, kind: output, shape index: {1}]
  %9 = xla_tuple %s7, %s8
  %s10 = sld [smem:[#allocation0]]
  $region46: #{cimle_field_forward.1} parent=0
    _
  %s12 = ssub.s32 1, %s10
  %s13 = scalar_select 0, %s12, %s10
  // Predicated region
  $region2: #{cimle_field_forward.1} parent=0 // pred_check
    _
  $region3: #{cimle_field_forward.1} parent=0 // pred_check_branch
    %15 = sbr.rel (0) target = $region5
  $region4: #{cimle_field_forward.1} parent=0 // pred_region
    _
  $region5: #{cimle_field_forward.1} parent=0 // pred_fallthru
    _
  // Predicated region
  $region6: #{cimle_field_forward.1} parent=0 // pred_check
    _
  $region7: #{cimle_field_forward.1} parent=0 // pred_check_branch
    %17 = sbr.rel (0) target = $region9
  $region8: #{cimle_field_forward.1} parent=0 // pred_region
    _
  $region9: #{cimle_field_forward.1} parent=0 // pred_fallthru
    _
  // Predicated region
  $region10: #{cimle_field_forward.1} parent=0 // pred_check
    _
  $region11: #{cimle_field_forward.1} parent=0 // pred_check_branch
    %19 = sbr.rel (0) target = $region13
  $region12: #{cimle_field_forward.1} parent=0 // pred_region
    _
  $region13: #{cimle_field_forward.1} parent=0 // pred_fallthru
    _
  // Predicated region
  $region14: #{cimle_field_forward.1} parent=0 // pred_check
    _
  $region15: #{cimle_field_forward.1} parent=0 // pred_check_branch
    %21 = sbr.rel (0) target = $region17
  $region16: #{cimle_field_forward.1} parent=0 // pred_region
    _
  $region17: #{cimle_field_forward.1} parent=0 // pred_fallthru
    _
  // Predicated region
  $region18: #{cimle_field_forward.1} parent=0 // pred_check
    _
  $region19: #{cimle_field_forward.1} parent=0 // pred_check_branch
    %23 = sbr.rel (0) target = $region21
  $region20: #{cimle_field_forward.1} parent=0 // pred_region
    _
  $region21: #{cimle_field_forward.1} parent=0 // pred_fallthru
    _
  // Predicated region
  $region22: #{cimle_field_forward.1} parent=0 // pred_check
    _
  $region23: #{cimle_field_forward.1} parent=0 // pred_check_branch
    %25 = sbr.rel (0) target = $region25
  $region24: #{cimle_field_forward.1} parent=0 // pred_region
    _
  $region25: #{cimle_field_forward.1} parent=0 // pred_fallthru
    _
  // Predicated region
  $region26: #{cimle_field_forward.1} parent=0 // pred_check
    _
  $region27: #{cimle_field_forward.1} parent=0 // pred_check_branch
    %27 = sbr.rel (0) target = $region29
  $region28: #{cimle_field_forward.1} parent=0 // pred_region
    _
  $region29: #{cimle_field_forward.1} parent=0 // pred_fallthru
    _
  %v28 = vld [vmem:[%s0] sm:$0xff]
  %v29 = vld [vmem:[%s0 + $0x8] sm:$0xff]
  %v30 = vld [vmem:[%s0 + $0x10] sm:$0xff]
  %v31 = vld [vmem:[%s0 + $0x18] sm:$0xff]
  %v32 = vld [vmem:[%s1] sm:$0xff]
  %v33 = vld [vmem:[%s1 + $0x8] sm:$0xff]
  %v34 = vld [vmem:[%s1 + $0x10] sm:$0xff]
  %v35 = vld [vmem:[%s1 + $0x18] sm:$0xff]
  %v36 = vadd.f32 %v32, %v28
  %v37 = vadd.f32 %v33, %v29
  %v38 = vadd.f32 %v34, %v30
  %v39 = vadd.f32 %v35, %v31
  %v40 = vld [vmem:[%s2] sm:$0xff]
  %v41 = vld [vmem:[%s2 + $0x8] sm:$0xff]
  %v42 = vld [vmem:[%s2 + $0x10] sm:$0xff]
  %v43 = vld [vmem:[%s2 + $0x18] sm:$0xff]
  %v44 = vld [vmem:[%s2 + $0x20] sm:$0xff]
  %v45 = vld [vmem:[%s2 + $0x28] sm:$0xff]
  %v46 = vld [vmem:[%s2 + $0x30] sm:$0xff]
  %v47 = vld [vmem:[%s2 + $0x38] sm:$0xff]
  %v48 = vld [vmem:[%s2 + $0x40] sm:$0xff]
  %v49 = vld [vmem:[%s2 + $0x48] sm:$0xff]
  %v50 = vld [vmem:[%s2 + $0x50] sm:$0xff]
  %v51 = vld [vmem:[%s2 + $0x58] sm:$0xff]
  %v52 = vld [vmem:[%s2 + $0x60] sm:$0xff]
  %v53 = vld [vmem:[%s2 + $0x68] sm:$0xff]
  %v54 = vld [vmem:[%s2 + $0x70] sm:$0xff]
  %v55 = vld [vmem:[%s2 + $0x78] sm:$0xff]
  %v56 = vld [vmem:[%s3] sm:$0x1]
  %v58 = vperm.slane %v56, 0
  %60 = vmatpush.msra.mxu0 %v55
  %61 = vmatpush.msra.mxu0 %v54
  %62 = vmatpush.msra.mxu0 %v53
  %63 = vmatpush.msra.mxu0 %v52
  %64 = vmatpush.msra.mxu0 %v51
  %65 = vmatpush.msra.mxu0 %v50
  %66 = vmatpush.msra.mxu0 %v49
  %67 = vmatpush.msra.mxu0 %v48
  %68 = vmatpush.msra.mxu0 %v47
  %69 = vmatpush.msra.mxu0 %v46
  %70 = vmatpush.msra.mxu0 %v45
  %71 = vmatpush.msra.mxu0 %v44
  %72 = vmatpush.msra.mxu0 %v43
  %73 = vmatpush.msra.mxu0 %v42
  %74 = vmatpush.msra.mxu0 %v41
  %75 = vmatpush.msra.mxu0 %v40
  %76 = vmatmul.f32.gmra.mxu0 %v36
  %v77 = vpop.f32.mrf.mxu0
  %v78 = vadd.f32 %v58, %v77
  %79 = vmatmul.f32.gmra.mxu0 %v37
  %v80 = vpop.f32.mrf.mxu0
  %v81 = vadd.f32 %v58, %v80
  %82 = vmatmul.f32.gmra.mxu0 %v38
  %v83 = vpop.f32.mrf.mxu0
  %v84 = vadd.f32 %v58, %v83
  %85 = vmatmul.f32.gmra.mxu0 %v39
  %v86 = vpop.f32.mrf.mxu0
  %v87 = vadd.f32 %v58, %v86
  %88 = vdwg.mxu0
  %v89 = vmax.f32 %v78, 0.0
  %v90 = vmax.f32 %v81, 0.0
  %v91 = vmax.f32 %v84, 0.0
  %v92 = vmax.f32 %v87, 0.0
  %v93 = vld [vmem:[%s4] sm:$0xff]
  %v94 = vld [vmem:[%s4 + $0x8] sm:$0xff]
  %v95 = vld [vmem:[%s4 + $0x10] sm:$0xff]
  %v96 = vld [vmem:[%s4 + $0x18] sm:$0xff]
  %v97 = vld [vmem:[%s4 + $0x20] sm:$0xff]
  %v98 = vld [vmem:[%s4 + $0x28] sm:$0xff]
  %v99 = vld [vmem:[%s4 + $0x30] sm:$0xff]
  %v100 = vld [vmem:[%s4 + $0x38] sm:$0xff]
  %v101 = vld [vmem:[%s4 + $0x40] sm:$0xff]
  %v102 = vld [vmem:[%s4 + $0x48] sm:$0xff]
  %v103 = vld [vmem:[%s4 + $0x50] sm:$0xff]
  %v104 = vld [vmem:[%s4 + $0x58] sm:$0xff]
  %v105 = vld [vmem:[%s4 + $0x60] sm:$0xff]
  %v106 = vld [vmem:[%s4 + $0x68] sm:$0xff]
  %v107 = vld [vmem:[%s4 + $0x70] sm:$0xff]
  %v108 = vld [vmem:[%s4 + $0x78] sm:$0xff]
  %v109 = vld [vmem:[%s5] sm:$0x1]
  %v111 = vperm.slane %v109, 0
  %113 = vmatpush.msra.mxu0 %v108
  %114 = vmatpush.msra.mxu0 %v107
  %115 = vmatpush.msra.mxu0 %v106
  %116 = vmatpush.msra.mxu0 %v105
  %117 = vmatpush.msra.mxu0 %v104
  %118 = vmatpush.msra.mxu0 %v103
  %119 = vmatpush.msra.mxu0 %v102
  %120 = vmatpush.msra.mxu0 %v101
  %121 = vmatpush.msra.mxu0 %v100
  %122 = vmatpush.msra.mxu0 %v99
  %123 = vmatpush.msra.mxu0 %v98
  %124 = vmatpush.msra.mxu0 %v97
  %125 = vmatpush.msra.mxu0 %v96
  %126 = vmatpush.msra.mxu0 %v95
  %127 = vmatpush.msra.mxu0 %v94
  %128 = vmatpush.msra.mxu0 %v93
  %129 = vmatmul.f32.gmra.mxu0 %v89
  %v130 = vpop.f32.mrf.mxu0
  %v131 = vadd.f32 %v111, %v130
  %132 = vmatmul.f32.gmra.mxu0 %v90
  %v133 = vpop.f32.mrf.mxu0
  %v134 = vadd.f32 %v111, %v133
  %135 = vmatmul.f32.gmra.mxu0 %v91
  %v136 = vpop.f32.mrf.mxu0
  %v137 = vadd.f32 %v111, %v136
  %138 = vmatmul.f32.gmra.mxu0 %v92
  %v139 = vpop.f32.mrf.mxu0
  %v140 = vadd.f32 %v111, %v139
  %141 = vdwg.mxu0
  %v142 = vadd.f32 %v32, %v131
  %v143 = vadd.f32 %v33, %v134
  %v144 = vadd.f32 %v34, %v137
  %v145 = vadd.f32 %v35, %v140
  %146 = vst [vmem:[%s7] sm:$0xff] %v142
  %147 = vst [vmem:[%s7 + $0x8] sm:$0xff] %v143
  %148 = vst [vmem:[%s7 + $0x10] sm:$0xff] %v144
  %149 = vst [vmem:[%s7 + $0x18] sm:$0xff] %v145
  %v150 = vmul.f32 %v131, %v131
  %v151 = vmul.f32 %v134, %v134
  %v152 = vmul.f32 %v137, %v137
  %v153 = vmul.f32 %v140, %v140
  %v154 = vld [vmem:[%s6] sm:$0xff]
  %v155 = vld [vmem:[%s6 + $0x8] sm:$0xff]
  %v156 = vld [vmem:[%s6 + $0x10] sm:$0xff]
  %v157 = vld [vmem:[%s6 + $0x18] sm:$0xff]
  %v158 = vld [vmem:[%s6 + $0x20] sm:$0xff]
  %v159 = vld [vmem:[%s6 + $0x28] sm:$0xff]
  %v160 = vld [vmem:[%s6 + $0x30] sm:$0xff]
  %v161 = vld [vmem:[%s6 + $0x38] sm:$0xff]
  %v162 = vld [vmem:[%s6 + $0x40] sm:$0xff]
  %v163 = vld [vmem:[%s6 + $0x48] sm:$0xff]
  %v164 = vld [vmem:[%s6 + $0x50] sm:$0xff]
  %v165 = vld [vmem:[%s6 + $0x58] sm:$0xff]
  %v166 = vld [vmem:[%s6 + $0x60] sm:$0xff]
  %v167 = vld [vmem:[%s6 + $0x68] sm:$0xff]
  %v168 = vld [vmem:[%s6 + $0x70] sm:$0xff]
  %v169 = vld [vmem:[%s6 + $0x78] sm:$0xff]
  %170 = vmatpush.msra.mxu0 %v169
  %171 = vmatpush.msra.mxu0 %v168
  %172 = vmatpush.msra.mxu0 %v167
  %173 = vmatpush.msra.mxu0 %v166
  %174 = vmatpush.msra.mxu0 %v165
  %175 = vmatpush.msra.mxu0 %v164
  %176 = vmatpush.msra.mxu0 %v163
  %177 = vmatpush.msra.mxu0 %v162
  %178 = vmatpush.msra.mxu0 %v161
  %179 = vmatpush.msra.mxu0 %v160
  %180 = vmatpush.msra.mxu0 %v159
  %181 = vmatpush.msra.mxu0 %v158
  %182 = vmatpush.msra.mxu0 %v157
  %183 = vmatpush.msra.mxu0 %v156
  %184 = vmatpush.msra.mxu0 %v155
  %185 = vmatpush.msra.mxu0 %v154
  %186 = vmatmul.f32.gmra.mxu0 %v150
  %v187 = vpop.f32.mrf.mxu0
  %v188 = vadd.f32 0.0, %v187
  %189 = vmatmul.f32.gmra.mxu0 %v151
  %v190 = vpop.f32.mrf.mxu0
  %v191 = vadd.f32 0.0, %v190
  %192 = vmatmul.f32.gmra.mxu0 %v152
  %v193 = vpop.f32.mrf.mxu0
  %v194 = vadd.f32 0.0, %v193
  %195 = vmatmul.f32.gmra.mxu0 %v153
  %v196 = vpop.f32.mrf.mxu0
  %v197 = vadd.f32 0.0, %v196
  %198 = vdwg.mxu0
  %vm199 = vcmask 31744
  %200 = vst.msk [vmem:[%s8] sm:$0xff] %vm199, %v188
  %201 = vst.msk [vmem:[%s8 + $0x8] sm:$0xff] %vm199, %v191
  %202 = vst.msk [vmem:[%s8 + $0x10] sm:$0xff] %vm199, %v194
  %203 = vst.msk [vmem:[%s8 + $0x18] sm:$0xff] %vm199, %v197
  // Predicated region
  $region30: #{cimle_field_forward.1} parent=0 // pred_check
    _
  $region31: #{cimle_field_forward.1} parent=0 // pred_check_branch
    %205 = sbr.rel (0) target = $region33
  $region32: #{cimle_field_forward.1} parent=0 // pred_region
    _
  $region33: #{cimle_field_forward.1} parent=0 // pred_fallthru
    _
  // Predicated region
  $region34: #{cimle_field_forward.1} parent=0 // pred_check
    _
  $region35: #{cimle_field_forward.1} parent=0 // pred_check_branch
    %207 = sbr.rel (0) target = $region37
  $region36: #{cimle_field_forward.1} parent=0 // pred_region
    _
  $region37: #{cimle_field_forward.1} parent=0 // pred_fallthru
    _
  // Predicated region
  $region38: #{cimle_field_forward.1} parent=0 // pred_check
    _
  $region39: #{cimle_field_forward.1} parent=0 // pred_check_branch
    %209 = sbr.rel (0) target = $region41
  $region40: #{cimle_field_forward.1} parent=0 // pred_region
    _
  $region41: #{cimle_field_forward.1} parent=0 // pred_fallthru
    _
  // Predicated region
  $region42: #{cimle_field_forward.1} parent=0 // pred_check
    _
  $region43: #{cimle_field_forward.1} parent=0 // pred_check_branch
    %211 = sbr.rel (0) target = $region45
  $region44: #{cimle_field_forward.1} parent=0 // pred_region
    _
  $region45: #{cimle_field_forward.1} parent=0 // pred_fallthru
    _

</llo_original>
